<compile_context>
chip_gen: v7x
topology: tpu7x:2x2x1
jax: 0.10.0
libtpu: 0.0.40
codegen_flags: <defaults>
</compile_context>

<pallas_src>
import jax
import jax.numpy as jnp
import numpy as np
from jax import lax
from jax.experimental import pallas as pl
from jax.experimental.pallas import tpu as pltpu


def _round_up(n: int, m: int) -> int:
    return ((n + m - 1) // m) * m


def _pad2(a, rows: int, cols: int):
    pr, pc = rows - a.shape[0], cols - a.shape[1]
    if pr == 0 and pc == 0:
        return a
    return jnp.pad(a, ((0, pr), (0, pc)))


# ----------------------------------------------------------------------------
# Kernels
# ----------------------------------------------------------------------------
def _svd_kernel_cached(x_ref, wvh_ref, wu_ref, bias_ref, o_ref, h_ref):
    """Grid = (M, N); N is 'arbitrary'. h is computed once per M tile."""
    @pl.when(pl.program_id(1) == 0)
    def _():
        # h = x @ wvh^T : contract last axis of both operands (no explicit .T;
        # the MXU consumes the transposed operand for free).  f32 accumulate.
        h_ref[...] = lax.dot_general(
            x_ref[...], wvh_ref[...],
            dimension_numbers=(((1,), (1,)), ((), ())),
            preferred_element_type=jnp.float32)

    # y = h @ wu^T with K = comps (tiny).  Keep h in f32 (no double rounding);
    # casting the small wu tile to f32 on the VPU is negligible.
    y = lax.dot_general(
        h_ref[...], wu_ref[...].astype(jnp.float32),
        dimension_numbers=(((1,), (1,)), ((), ())),
        preferred_element_type=jnp.float32)
    o_ref[...] = (y + bias_ref[...]).astype(o_ref.dtype)


def _svd_kernel_recompute(x_ref, wvh_ref, wu_ref, bias_ref, o_ref):
    """Both grid axes 'parallel' (used when caching h has nothing to save or
    would leave a v7x TensorCore idle)."""
    h = lax.dot_general(
        x_ref[...], wvh_ref[...],
        dimension_numbers=(((1,), (1,)), ((), ())),
        preferred_element_type=jnp.float32)
    y = lax.dot_general(
        h, wu_ref[...].astype(jnp.float32),
        dimension_numbers=(((1,), (1,)), ((), ())),
        preferred_element_type=jnp.float32)
    o_ref[...] = (y + bias_ref[...]).astype(o_ref.dtype)


# ----------------------------------------------------------------------------
# Wrappers
# ----------------------------------------------------------------------------
def prepare_linear_svd_params(wu, wvh, bias, *, compute_dtype=jnp.bfloat16, tn=None):
    """Pad + cast the weights ONCE (hoisted out of the per-call path)."""
    out_features, comps = wu.shape
    comps2, in_features = wvh.shape
    assert comps2 == comps and bias.shape == (out_features,)

    in_p = _round_up(in_features, 128)     # lane-dense contraction dim
    c_p = _round_up(comps, 128)            # lane-dense wu / h last dim
    if tn is None:
        tn = min(512, _round_up(out_features, 128))
    n_p = _round_up(out_features, tn)

    wvh_p = _pad2(wvh.astype(compute_dtype), c_p, in_p)     # (c_p, in_p)
    wu_p = _pad2(wu.astype(compute_dtype), n_p, c_p)        # (n_p, c_p)
    bias_p = _pad2(bias.astype(jnp.float32).reshape(1, out_features), 1, n_p)

    return dict(wvh=wvh_p, wu=wu_p, bias=bias_p,
                in_features=in_features, out_features=out_features, comps=comps,
                in_p=in_p, c_p=c_p, n_p=n_p, tn=tn, compute_dtype=compute_dtype)


def linear_svd_apply(x, params, *, tm=None):
    batch, in_features = x.shape
    assert in_features == params["in_features"]
    compute_dtype = params["compute_dtype"]
    in_p, c_p, n_p, tn = (params[k] for k in ("in_p", "c_p", "n_p", "tn"))
    out_features, comps = params["out_features"], params["comps"]

    itemsize = jnp.dtype(compute_dtype).itemsize
    row_align = 8 * (4 // itemsize)        # 8 rows for f32, 16 for bf16 packing

    if tm is None:
        tm = min(512, _round_up(batch, row_align))
    m_p = _round_up(batch, tm)
    grid_n = n_p // tn
    # v7x has 2 TensorCores: if N must go "arbitrary" (for the h-cache), keep
    # >= 2 M tiles so the "parallel" M axis can still shard across cores.
    if grid_n > 1 and m_p // tm == 1 and batch > row_align:
        tm = _round_up((batch + 1) // 2, row_align)
        m_p = _round_up(batch, tm)
    grid_m = m_p // tm
    use_cached = grid_n > 1 and grid_m >= 2

    # Pad / cast x only when needed.
    x_c = x.astype(compute_dtype)
    if (m_p, in_p) != (batch, in_features):
        x_c = _pad2(x_c, m_p, in_p)

    # VMEM budget (double-buffered inputs/outputs + f32 h scratch).
    vmem_bytes = (2 * tm * in_p * itemsize          # x
                  + 2 * c_p * in_p * itemsize       # wvh (resident)
                  + 2 * tn * c_p * itemsize         # wu
                  + 2 * tn * 4                      # bias
                  + 2 * tm * tn * 4                 # out (f32)
                  + tm * c_p * 4)                   # h scratch
    vmem_limit = int(min(max(2 * vmem_bytes, 32 * 2 ** 20), 60 * 2 ** 20))

    # Advisory low-rank cost hint (not dense-matmul cost).
    flops = 2 * batch * in_features * comps + 2 * batch * comps * out_features
    bytes_accessed = (x_c.size * itemsize
                      + params["wvh"].size * itemsize
                      + params["wu"].size * itemsize
                      + params["bias"].size * 4
                      + m_p * n_p * 4)

    kernel = _svd_kernel_cached if use_cached else _svd_kernel_recompute
    scratch = ((pltpu.VMEM((tm, c_p), jnp.float32),) if use_cached else ())
    dim_sem = (("parallel", "arbitrary") if use_cached
               else ("parallel", "parallel"))

    out = pl.pallas_call(
        kernel,
        out_shape=jax.ShapeDtypeStruct((m_p, n_p), jnp.float32),
        grid_spec=pltpu.PrefetchScalarGridSpec(
            num_scalar_prefetch=0,
            grid=(grid_m, grid_n),
            in_specs=[
                pl.BlockSpec((tm, in_p), lambda i, j: (i, 0)),    # x tile (resident over j)
                pl.BlockSpec((c_p, in_p), lambda i, j: (0, 0)),   # wvh (grid-resident)
                pl.BlockSpec((tn, c_p), lambda i, j: (j, 0)),     # wu tile
                pl.BlockSpec((1, tn), lambda i, j: (0, j)),       # bias tile
            ],
            out_specs=pl.BlockSpec((tm, tn), lambda i, j: (i, j)),
            scratch_shapes=scratch),
        compiler_params=pltpu.CompilerParams(
            dimension_semantics=dim_sem,
            vmem_limit_bytes=vmem_limit),
        cost_estimate=pl.CostEstimate(flops=int(flops), transcendentals=0,
                                      bytes_accessed=int(bytes_accessed)),
    )(x_c, params["wvh"], params["wu"], params["bias"])

    if (m_p, n_p) != (batch, out_features):
        out = out[:batch, :out_features]
    return out


def linear_svd(x, wu, wvh, bias, *, compute_dtype=jnp.bfloat16, tm=None, tn=None):
    """One-shot convenience wrapper (pads weights per call; prefer
    prepare_linear_svd_params + linear_svd_apply in a real model)."""
    params = prepare_linear_svd_params(wu, wvh, bias,
                                       compute_dtype=compute_dtype, tn=tn)
    return linear_svd_apply(x, params, tm=tm)


# ----------------------------------------------------------------------------
# Reference + tests
# ----------------------------------------------------------------------------
def _ref_forward(x, wu, wvh, bias):
    x64 = np.asarray(x, np.float64)
    wu64 = np.asarray(wu, np.float64)
    wvh64 = np.asarray(wvh, np.float64)
    b64 = np.asarray(bias, np.float64)
    return x64 @ (wu64 @ wvh64).T + b64[None]


def _bf16_round64(a):
    return np.asarray(jnp.asarray(a).astype(jnp.bfloat16).astype(jnp.float32),
                      np.float64)


if __name__ == "__main__":
    # Module-default toy shapes.
    in_features, out_features, svd_components, batch = 6, 3, 2, 8

    sqrt_k = float(np.sqrt(1.0 / out_features))
    key = jax.random.PRNGKey(0)
    k_wu, k_wvh, k_b, k_x = jax.random.split(key, 4)

    # torch.rand -> U[0,1); params are 2*sqrt_k*U - sqrt_k == U[-sqrt_k, sqrt_k)
    wu = 2.0 * sqrt_k * jax.random.uniform(
        k_wu, (out_features, svd_components), dtype=jnp.float32) - sqrt_k
    wvh = 2.0 * sqrt_k * jax.random.uniform(
        k_wvh, (svd_components, in_features), dtype=jnp.float32) - sqrt_k
    bias = 2.0 * sqrt_k * jax.random.uniform(
        k_b, (out_features,), dtype=jnp.float32) - sqrt_k
    x = jax.random.normal(k_x, (batch, in_features), dtype=jnp.float32)

    # f32 compute path — tight check against float64 reference.
    y = jax.block_until_ready(linear_svd(x, wu, wvh, bias,
                                         compute_dtype=jnp.float32))
    np.testing.assert_allclose(np.asarray(y), _ref_forward(x, wu, wvh, bias),
                               rtol=1e-4, atol=1e-4)

    # Default (bf16 inputs / f32 accumulate) path, looser tolerance.
    y_bf16 = jax.block_until_ready(linear_svd(x, wu, wvh, bias))
    np.testing.assert_allclose(np.asarray(y_bf16),
                               _ref_forward(x, wu, wvh, bias),
                               rtol=2e-2, atol=2e-2)

    # Larger shape: exercises the 2x2 grid with the cached-h ("parallel",
    # "arbitrary") kernel and the hoisted-weight-prep path.
    b2, in2, out2, c2 = 192, 256, 1024, 16
    k1, k2, k3, k4 = jax.random.split(jax.random.PRNGKey(1), 4)
    wu2 = jax.random.normal(k1, (out2, c2), dtype=jnp.float32) * 0.1
    wvh2 = jax.random.normal(k2, (c2, in2), dtype=jnp.float32) * 0.1
    bias2 = jax.random.normal(k3, (out2,), dtype=jnp.float32) * 0.1
    x2 = jax.random.normal(k4, (b2, in2), dtype=jnp.float32)

    params2 = prepare_linear_svd_params(wu2, wvh2, bias2)   # pad/cast once
    y2 = jax.block_until_ready(linear_svd_apply(x2, params2))
    # Compare against the exactly bf16-rounded inputs (kernel accumulates f32,
    # keeps h and bias in f32), so tolerance can stay tight.
    ref2 = (_bf16_round64(x2) @ (_bf16_round64(wu2) @ _bf16_round64(wvh2)).T
            + np.asarray(bias2, np.float64)[None])
    np.testing.assert_allclose(np.asarray(y2), ref2, rtol=1e-3, atol=1e-3)

    print("KERNEL_OK")
</pallas_src>

<mosaic_0001>
module attributes {stable_mosaic.version = 11 : i64} {
  func.func @_svd_kernel_recompute(%arg0: i32, %arg1: i32, %arg2: memref<8x128xf32, #tpu.memory_space<vmem>>, %arg3: memref<128x128xf32, #tpu.memory_space<vmem>>, %arg4: memref<128x128xf32, #tpu.memory_space<vmem>>, %arg5: memref<1x128xf32, #tpu.memory_space<vmem>>, %arg6: memref<8x128xf32, #tpu.memory_space<vmem>>) attributes {dimension_semantics = [#tpu.dimension_semantics<parallel>, #tpu.dimension_semantics<parallel>], iteration_bounds = array<i64: 1, 1>, scalar_prefetch = 0 : i64, scratch_operands = 0 : i64, tpu.core_type = #tpu.core_type<tc>, window_params = [{transform_indices = @transform_0, window_bounds = array<i64: 8, 128>}, {pipeline_mode = #tpu.pipeline_mode<synchronous>, transform_indices = @transform_1, window_bounds = array<i64: 128, 128>}, {transform_indices = @transform_2, window_bounds = array<i64: 128, 128>}, {transform_indices = @transform_3, window_bounds = array<i64: 1, 128>}, {transform_indices = @transform_4, window_bounds = array<i64: 8, 128>}]} {
    %c0 = arith.constant 0 : index
    %c0_0 = arith.constant 0 : index
    %0 = vector.load %arg2[%c0, %c0_0] : memref<8x128xf32, #tpu.memory_space<vmem>>, vector<8x128xf32>
    %c0_1 = arith.constant 0 : index
    %c0_2 = arith.constant 0 : index
    %1 = vector.load %arg3[%c0_1, %c0_2] : memref<128x128xf32, #tpu.memory_space<vmem>>, vector<128x128xf32>
    %cst = arith.constant dense<0.000000e+00> : vector<8x128xf32>
    %2 = tpu.matmul %0, %1, %cst {dimension_numbers = #tpu.dot_dimension_numbers<[1], [1], [0], [0], [0, 0, 1, 0], [], []>} : vector<8x128xf32>, vector<128x128xf32>, vector<8x128xf32> -> vector<8x128xf32>
    %c0_3 = arith.constant 0 : index
    %c0_4 = arith.constant 0 : index
    %3 = vector.load %arg4[%c0_3, %c0_4] : memref<128x128xf32, #tpu.memory_space<vmem>>, vector<128x128xf32>
    %cst_5 = arith.constant dense<0.000000e+00> : vector<8x128xf32>
    %4 = tpu.matmul %2, %3, %cst_5 {dimension_numbers = #tpu.dot_dimension_numbers<[1], [1], [0], [0], [0, 0, 1, 0], [], []>} : vector<8x128xf32>, vector<128x128xf32>, vector<8x128xf32> -> vector<8x128xf32>
    %c0_6 = arith.constant 0 : index
    %c0_7 = arith.constant 0 : index
    %5 = vector.load %arg5[%c0_6, %c0_7] : memref<1x128xf32, #tpu.memory_space<vmem>>, vector<1x128xf32>
    %6 = vector.broadcast %5 : vector<1x128xf32> to vector<8x128xf32>
    %7 = arith.addf %4, %6 : vector<8x128xf32>
    %c0_8 = arith.constant 0 : index
    %c0_9 = arith.constant 0 : index
    %8 = vector.load %arg6[%c0_8, %c0_9] : memref<8x128xf32, #tpu.memory_space<vmem>>, vector<8x128xf32>
    tpu.vector_store %arg6[%c0_8, %c0_9], %7 {strides = array<i32>} : memref<8x128xf32, #tpu.memory_space<vmem>>, vector<8x128xf32>,
    return
  }
  func.func @transform_0(%arg0: i32, %arg1: i32) -> (i32, i32) {
    %c0_i32 = arith.constant 0 : i32
    %c0_i32_0 = arith.constant 0 : i32
    return %arg0, %c0_i32 : i32, i32
  }
  func.func @transform_1(%arg0: i32, %arg1: i32) -> (i32, i32) {
    %c0_i32 = arith.constant 0 : i32
    %c0_i32_0 = arith.constant 0 : i32
    %c0_i32_1 = arith.constant 0 : i32
    return %c0_i32, %c0_i32_0 : i32, i32
  }
  func.func @transform_2(%arg0: i32, %arg1: i32) -> (i32, i32) {
    %c0_i32 = arith.constant 0 : i32
    %c0_i32_0 = arith.constant 0 : i32
    return %arg1, %c0_i32 : i32, i32
  }
  func.func @transform_3(%arg0: i32, %arg1: i32) -> (i32, i32) {
    %c0_i32 = arith.constant 0 : i32
    %c0_i32_0 = arith.constant 0 : i32
    return %c0_i32, %arg1 : i32, i32
  }
  func.func @transform_4(%arg0: i32, %arg1: i32) -> (i32, i32) {
    %c0_i32 = arith.constant 0 : i32
    return %arg0, %arg1 : i32, i32
  }
}

</mosaic_0001>

<llo_original>
// kernel: tpu_custom_call.1
$region0: #{tpu_custom_call.1}
  #allocation0 [shape = 'u32[]', space=smem, size = 0x4, offset = 0x4, fixed_abs, tag = 'smem constant byte address 0x4 - core index']
  #allocation1 [shape = 'u32[144,128]{1,0:T(1,128)}', space=vmem, size = 0x12000, scoped, tag = 'internal scratch']
  %s0 = inlined_call_operand.hbm [shape: f32[8,128], index: 0, kind: input, shape index: {}]
  %s1 = inlined_call_operand.hbm [shape: f32[128,128], index: 1, kind: input, shape index: {}]
  %s2 = inlined_call_operand.hbm [shape: f32[128,128], index: 2, kind: input, shape index: {}]
  %s3 = inlined_call_operand.vmem [shape: f32[1,128], index: 3, kind: input, shape index: {}]
  %s4 = inlined_call_operand.hbm [shape: f32[8,128], index: 4, kind: output, shape index: {}]
  %s5 = sld [smem:[#allocation0]]
  $region38: #{tpu_custom_call.1} parent=0
    _
  %s7 = ssub.s32 1, %s5
  %s8 = scalar_select 0, %s7, %s5
  $region1: #{tpu_custom_call.1} parent=0
    #allocation2 [shape = 'u8[4096]{0}', space=vmem, size = 0x1000, scoped, tag = 'input window, operand 0, single buffered']
    #allocation3 [shape = 's32[1]{0}', space=sflag, size = 0x4, scoped, tag = 'scoped memory for tpu_custom_call.1']
    #allocation4 [shape = 's32[1]{0}', space=sflag, size = 0x4, scoped, tag = 'scoped memory for tpu_custom_call.1']
    #allocation5 [shape = 'u8[65536]{0}', space=vmem, size = 0x10000, scoped, tag = 'input window, operand 1, single buffered']
    #allocation6 [shape = 's32[1]{0}', space=sflag, size = 0x4, scoped, tag = 'scoped memory for tpu_custom_call.1']
    #allocation7 [shape = 'u8[65536]{0}', space=vmem, size = 0x10000, scoped, tag = 'input window, operand 2, single buffered']
    #allocation8 [shape = 'u8[4096]{0}', space=vmem, size = 0x1000, scoped, tag = 'output window, operand 0, single buffered']
    %9 = vsyncpa [#allocation3], 0
    %10 = vsyncpa [#allocation6], 0
    %11 = vsyncpa [#allocation4], 0
    // Predicated region
    $region2: #{tpu_custom_call.1} parent=1 // pred_check
      _
    $region3: #{tpu_custom_call.1} parent=1 // pred_check_branch
      %13 = sbr.rel (0) target = $region5
    $region4: #{tpu_custom_call.1} parent=1 // pred_region
      %s15 = ssub.s32 128, 128
      %16 = vsyncadd [#allocation3], %s15
      %s18 = sshll.u32 [#allocation2], 4
      %s19 = int_to_ptr.vmem [resolvable:$true] %s18
      %21 = dma.hbm_to_vmem [thread:$0]  %s0, 128, %s19, [#allocation3]
    $region5: #{tpu_custom_call.1} parent=1 // pred_fallthru
      _
    // Predicated region
    $region6: #{tpu_custom_call.1} parent=1 // pred_check
      _
    $region7: #{tpu_custom_call.1} parent=1 // pred_check_branch
      %23 = sbr.rel (0) target = $region9
    $region8: #{tpu_custom_call.1} parent=1 // pred_region
      %s25 = ssub.s32 2048, 2048
      %26 = vsyncadd [#allocation6], %s25
      %s27 = sshll.u32 [#allocation5], 4
      %s28 = int_to_ptr.vmem [resolvable:$true] %s27
      %33 = dma.hbm_to_vmem [thread:$0]  %s1, 2048, %s28, [#allocation6], 128, 128, 8
    $region9: #{tpu_custom_call.1} parent=1 // pred_fallthru
      _
    // Predicated region
    $region10: #{tpu_custom_call.1} parent=1 // pred_check
      _
    $region11: #{tpu_custom_call.1} parent=1 // pred_check_branch
      %35 = sbr.rel (0) target = $region13
    $region12: #{tpu_custom_call.1} parent=1 // pred_region
      %s37 = ssub.s32 2048, 2048
      %38 = vsyncadd [#allocation6], %s37
      %s39 = sshll.u32 [#allocation7], 4
      %s40 = int_to_ptr.vmem [resolvable:$true] %s39
      %45 = dma.hbm_to_vmem [thread:$0]  %s2, 2048, %s40, [#allocation6], 128, 128, 8
    $region13: #{tpu_custom_call.1} parent=1 // pred_fallthru
      _
    // Predicated region
    $region14: #{tpu_custom_call.1} parent=1 // pred_check
      _
    $region15: #{tpu_custom_call.1} parent=1 // pred_check_branch
      %47 = sbr.rel (0) target = $region17
    $region16: #{tpu_custom_call.1} parent=1 // pred_region
      _
    $region17: #{tpu_custom_call.1} parent=1 // pred_fallthru
      _
    // Predicated region
    $region18: #{tpu_custom_call.1} parent=1 // pred_check
      _
    $region19: #{tpu_custom_call.1} parent=1 // pred_check_branch
      %49 = sbr.rel (0) target = $region21
    $region20: #{tpu_custom_call.1} parent=1 // pred_region
      %50 = dma.done [#allocation3], 128
    $region21: #{tpu_custom_call.1} parent=1 // pred_fallthru
      _
    // Predicated region
    $region22: #{tpu_custom_call.1} parent=1 // pred_check
      _
    $region23: #{tpu_custom_call.1} parent=1 // pred_check_branch
      %52 = sbr.rel (0) target = $region25
    $region24: #{tpu_custom_call.1} parent=1 // pred_region
      %53 = dma.done [#allocation6], 2048
    $region25: #{tpu_custom_call.1} parent=1 // pred_fallthru
      _
    // Predicated region
    $region26: #{tpu_custom_call.1} parent=1 // pred_check
      _
    $region27: #{tpu_custom_call.1} parent=1 // pred_check_branch
      %55 = sbr.rel (0) target = $region29
    $region28: #{tpu_custom_call.1} parent=1 // pred_region
      %56 = dma.done [#allocation6], 2048
    $region29: #{tpu_custom_call.1} parent=1 // pred_fallthru
      _
    %v57 = vld [vmem:[#allocation2] sm:$0xff]
    %v58 = vld [vmem:[#allocation5] sm:$0xff]
    %v59 = vld [vmem:[#allocation5 + $0x8] sm:$0xff]
    %v60 = vld [vmem:[#allocation5 + $0x10] sm:$0xff]
    %v61 = vld [vmem:[#allocation5 + $0x18] sm:$0xff]
    %v62 = vld [vmem:[#allocation5 + $0x20] sm:$0xff]
    %v63 = vld [vmem:[#allocation5 + $0x28] sm:$0xff]
    %v64 = vld [vmem:[#allocation5 + $0x30] sm:$0xff]
    %v65 = vld [vmem:[#allocation5 + $0x38] sm:$0xff]
    %v66 = vld [vmem:[#allocation5 + $0x40] sm:$0xff]
    %v67 = vld [vmem:[#allocation5 + $0x48] sm:$0xff]
    %v68 = vld [vmem:[#allocation5 + $0x50] sm:$0xff]
    %v69 = vld [vmem:[#allocation5 + $0x58] sm:$0xff]
    %v70 = vld [vmem:[#allocation5 + $0x60] sm:$0xff]
    %v71 = vld [vmem:[#allocation5 + $0x68] sm:$0xff]
    %v72 = vld [vmem:[#allocation5 + $0x70] sm:$0xff]
    %v73 = vld [vmem:[#allocation5 + $0x78] sm:$0xff]
    %74 = vmatprep.subr.mxu0 0.0
    %75 = vmatpush1.xpose.msra.mxu0 %v58
    %76 = vmatprep.subr.mxu0 0.0
    %77 = vmatpush1.xpose.msra.mxu0 %v59
    %78 = vmatprep.subr.mxu0 0.0
    %79 = vmatpush1.xpose.msra.mxu0 %v60
    %80 = vmatprep.subr.mxu0 0.0
    %81 = vmatpush1.xpose.msra.mxu0 %v61
    %82 = vmatprep.subr.mxu0 0.0
    %83 = vmatpush1.xpose.msra.mxu0 %v62
    %84 = vmatprep.subr.mxu0 0.0
    %85 = vmatpush1.xpose.msra.mxu0 %v63
    %86 = vmatprep.subr.mxu0 0.0
    %87 = vmatpush1.xpose.msra.mxu0 %v64
    %88 = vmatprep.subr.mxu0 0.0
    %89 = vmatpush1.xpose.msra.mxu0 %v65
    %90 = vmatprep.subr.mxu0 0.0
    %91 = vmatpush1.xpose.msra.mxu0 %v66
    %92 = vmatprep.subr.mxu0 0.0
    %93 = vmatpush1.xpose.msra.mxu0 %v67
    %94 = vmatprep.subr.mxu0 0.0
    %95 = vmatpush1.xpose.msra.mxu0 %v68
    %96 = vmatprep.subr.mxu0 0.0
    %97 = vmatpush1.xpose.msra.mxu0 %v69
    %98 = vmatprep.subr.mxu0 0.0
    %99 = vmatpush1.xpose.msra.mxu0 %v70
    %100 = vmatprep.subr.mxu0 0.0
    %101 = vmatpush1.xpose.msra.mxu0 %v71
    %102 = vmatprep.subr.mxu0 0.0
    %103 = vmatpush1.xpose.msra.mxu0 %v72
    %104 = vmatprep.subr.mxu0 0.0
    %105 = vmatpush1.xpose.msra.mxu0 %v73
    %106 = vmatprep.subr.mxu0 0.0
    %107 = vmatpush1.xpose.msra.mxu0 0.0
    %108 = vmatprep.subr.mxu0 0.0
    %109 = vmatpush1.xpose.msra.mxu0 0.0
    %110 = vmatprep.subr.mxu0 0.0
    %111 = vmatpush1.xpose.msra.mxu0 0.0
    %112 = vmatprep.subr.mxu0 0.0
    %113 = vmatpush1.xpose.msra.mxu0 0.0
    %114 = vmatprep.subr.mxu0 0.0
    %115 = vmatpush1.xpose.msra.mxu0 0.0
    %116 = vmatprep.subr.mxu0 0.0
    %117 = vmatpush1.xpose.msra.mxu0 0.0
    %118 = vmatprep.subr.mxu0 0.0
    %119 = vmatpush1.xpose.msra.mxu0 0.0
    %120 = vmatprep.subr.mxu0 0.0
    %121 = vmatpush1.xpose.msra.mxu0 0.0
    %122 = vmatprep.subr.mxu0 0.0
    %123 = vmatpush1.xpose.msra.mxu0 0.0
    %124 = vmatprep.subr.mxu0 0.0
    %125 = vmatpush1.xpose.msra.mxu0 0.0
    %126 = vmatprep.subr.mxu0 0.0
    %127 = vmatpush1.xpose.msra.mxu0 0.0
    %128 = vmatprep.subr.mxu0 0.0
    %129 = vmatpush1.xpose.msra.mxu0 0.0
    %130 = vmatprep.subr.mxu0 0.0
    %131 = vmatpush1.xpose.msra.mxu0 0.0
    %132 = vmatprep.subr.mxu0 0.0
    %133 = vmatpush1.xpose.msra.mxu0 0.0
    %134 = vmatprep.subr.mxu0 0.0
    %135 = vmatpush1.xpose.msra.mxu0 0.0
    %136 = vmatprep.subr.mxu0 0.0
    %137 = vmatpush1.xpose.msra.mxu0 0.0
    %138 = vmatprep.mubr.f32.mxu0 0.0
    %139 = vmatmul.mubr.f32.gmra.mrb[0].mxu0 %v57
    %v140 = vpop.f32.mrb[0].mxu0
    %v141 = vadd.f32 0.0, %v140
    %v142 = vpop.f32.mrb[0].mxu0
    %143 = vdwg.mxu0
    %v144 = vld [vmem:[#allocation7] sm:$0xff]
    %v145 = vld [vmem:[#allocation7 + $0x8] sm:$0xff]
    %v146 = vld [vmem:[#allocation7 + $0x10] sm:$0xff]
    %v147 = vld [vmem:[#allocation7 + $0x18] sm:$0xff]
    %v148 = vld [vmem:[#allocation7 + $0x20] sm:$0xff]
    %v149 = vld [vmem:[#allocation7 + $0x28] sm:$0xff]
    %v150 = vld [vmem:[#allocation7 + $0x30] sm:$0xff]
    %v151 = vld [vmem:[#allocation7 + $0x38] sm:$0xff]
    %v152 = vld [vmem:[#allocation7 + $0x40] sm:$0xff]
    %v153 = vld [vmem:[#allocation7 + $0x48] sm:$0xff]
    %v154 = vld [vmem:[#allocation7 + $0x50] sm:$0xff]
    %v155 = vld [vmem:[#allocation7 + $0x58] sm:$0xff]
    %v156 = vld [vmem:[#allocation7 + $0x60] sm:$0xff]
    %v157 = vld [vmem:[#allocation7 + $0x68] sm:$0xff]
    %v158 = vld [vmem:[#allocation7 + $0x70] sm:$0xff]
    %v159 = vld [vmem:[#allocation7 + $0x78] sm:$0xff]
    %v160 = vld [vmem:[%s3] sm:$0x1]
    %v162 = vlaneseq
    %v163 = vshrl.u32 %v162, 7
    %v164 = vsub.s32 0, %v163
    %v165 = vrot.slane %v160, %v164
    %167 = vmatprep.subr.mxu0 0.0
    %168 = vmatpush1.xpose.msra.mxu0 %v144
    %169 = vmatprep.subr.mxu0 0.0
    %170 = vmatpush1.xpose.msra.mxu0 %v145
    %171 = vmatprep.subr.mxu0 0.0
    %172 = vmatpush1.xpose.msra.mxu0 %v146
    %173 = vmatprep.subr.mxu0 0.0
    %174 = vmatpush1.xpose.msra.mxu0 %v147
    %175 = vmatprep.subr.mxu0 0.0
    %176 = vmatpush1.xpose.msra.mxu0 %v148
    %177 = vmatprep.subr.mxu0 0.0
    %178 = vmatpush1.xpose.msra.mxu0 %v149
    %179 = vmatprep.subr.mxu0 0.0
    %180 = vmatpush1.xpose.msra.mxu0 %v150
    %181 = vmatprep.subr.mxu0 0.0
    %182 = vmatpush1.xpose.msra.mxu0 %v151
    %183 = vmatprep.subr.mxu0 0.0
    %184 = vmatpush1.xpose.msra.mxu0 %v152
    %185 = vmatprep.subr.mxu0 0.0
    %186 = vmatpush1.xpose.msra.mxu0 %v153
    %187 = vmatprep.subr.mxu0 0.0
    %188 = vmatpush1.xpose.msra.mxu0 %v154
    %189 = vmatprep.subr.mxu0 0.0
    %190 = vmatpush1.xpose.msra.mxu0 %v155
    %191 = vmatprep.subr.mxu0 0.0
    %192 = vmatpush1.xpose.msra.mxu0 %v156
    %193 = vmatprep.subr.mxu0 0.0
    %194 = vmatpush1.xpose.msra.mxu0 %v157
    %195 = vmatprep.subr.mxu0 0.0
    %196 = vmatpush1.xpose.msra.mxu0 %v158
    %197 = vmatprep.subr.mxu0 0.0
    %198 = vmatpush1.xpose.msra.mxu0 %v159
    %199 = vmatprep.subr.mxu0 0.0
    %200 = vmatpush1.xpose.msra.mxu0 0.0
    %201 = vmatprep.subr.mxu0 0.0
    %202 = vmatpush1.xpose.msra.mxu0 0.0
    %203 = vmatprep.subr.mxu0 0.0
    %204 = vmatpush1.xpose.msra.mxu0 0.0
    %205 = vmatprep.subr.mxu0 0.0
    %206 = vmatpush1.xpose.msra.mxu0 0.0
    %207 = vmatprep.subr.mxu0 0.0
    %208 = vmatpush1.xpose.msra.mxu0 0.0
    %209 = vmatprep.subr.mxu0 0.0
    %210 = vmatpush1.xpose.msra.mxu0 0.0
    %211 = vmatprep.subr.mxu0 0.0
    %212 = vmatpush1.xpose.msra.mxu0 0.0
    %213 = vmatprep.subr.mxu0 0.0
    %214 = vmatpush1.xpose.msra.mxu0 0.0
    %215 = vmatprep.subr.mxu0 0.0
    %216 = vmatpush1.xpose.msra.mxu0 0.0
    %217 = vmatprep.subr.mxu0 0.0
    %218 = vmatpush1.xpose.msra.mxu0 0.0
    %219 = vmatprep.subr.mxu0 0.0
    %220 = vmatpush1.xpose.msra.mxu0 0.0
    %221 = vmatprep.subr.mxu0 0.0
    %222 = vmatpush1.xpose.msra.mxu0 0.0
    %223 = vmatprep.subr.mxu0 0.0
    %224 = vmatpush1.xpose.msra.mxu0 0.0
    %225 = vmatprep.subr.mxu0 0.0
    %226 = vmatpush1.xpose.msra.mxu0 0.0
    %227 = vmatprep.subr.mxu0 0.0
    %228 = vmatpush1.xpose.msra.mxu0 0.0
    %229 = vmatprep.subr.mxu0 0.0
    %230 = vmatpush1.xpose.msra.mxu0 0.0
    %231 = vmatprep.mubr.f32.mxu0 0.0
    %232 = vmatmul.mubr.f32.gmra.mrb[0].mxu0 %v141
    %v233 = vpop.f32.mrb[0].mxu0
    %v234 = vadd.f32 %v165, %v233
    %v235 = vpop.f32.mrb[0].mxu0
    %236 = vdwg.mxu0
    %237 = vst [vmem:[#allocation8] sm:$0xff] %v234
    // Predicated region
    $region30: #{tpu_custom_call.1} parent=1 // pred_check
      _
    $region31: #{tpu_custom_call.1} parent=1 // pred_check_branch
      %239 = sbr.rel (0) target = $region33
    $region32: #{tpu_custom_call.1} parent=1 // pred_region
      %s241 = ssub.s32 128, 128
      %242 = vsyncadd [#allocation4], %s241
      %s244 = sshll.u32 [#allocation8], 4
      %s245 = int_to_ptr.vmem [resolvable:$true] %s244
      %247 = dma.vmem_to_hbm [thread:$0]  %s245, 128, %s4, [#allocation4]
    $region33: #{tpu_custom_call.1} parent=1 // pred_fallthru
      _
    // Predicated region
    $region34: #{tpu_custom_call.1} parent=1 // pred_check
      _
    $region35: #{tpu_custom_call.1} parent=1 // pred_check_branch
      %249 = sbr.rel (0) target = $region37
    $region36: #{tpu_custom_call.1} parent=1 // pred_region
      %250 = dma.done [#allocation4], 128
    $region37: #{tpu_custom_call.1} parent=1 // pred_fallthru
      _
    %251 = vsyncpa [#allocation3], 1
    %252 = vsyncpa [#allocation6], 1
    %253 = vsyncpa [#allocation4], 1

</llo_original>
